<compile_context>
chip_gen: v5e
topology: v5e:2x2
jax: 0.10.0
libtpu: 0.0.40
codegen_flags: <defaults>
</compile_context>

<pallas_src>
import functools
import math

import jax
import jax.numpy as jnp
from jax import lax
from jax.experimental import pallas as pl
from jax.experimental.pallas import tpu as pltpu


def _mha_kernel(xq_ref, xk_ref, xv_ref, w_ref, b_ref, o_ref,
                *, n_heads, d_k, d_model):
    f32 = jnp.float32
    bf16 = jnp.bfloat16
    D = d_model

    xq = xq_ref[0]          # (tq, D) bf16 (cast host-side)
    xk = xk_ref[0]          # (S,  D) bf16
    xv = xv_ref[0]          # (S,  D) bf16

    w = w_ref[...]          # (D, 4D) bf16: [Wq.T*scale | Wk.T | Wv.T | Wo.T]
    b = b_ref[...]          # (1, 4D) f32 : [bq*scale   | bk   | bv   | bo  ]

    wq, wk, wv, wo = (w[:, i * D:(i + 1) * D] for i in range(4))
    bq, bk, bv, bo = (b[:, i * D:(i + 1) * D] for i in range(4))

    # Projections: (rows, D) @ (D, D) on the MXU with f32 accumulation.
    # The attention scale is already folded into wq / bq.
    Q = jnp.dot(xq, wq, preferred_element_type=f32) + bq      # (tq, D)
    K = jnp.dot(xk, wk, preferred_element_type=f32) + bk      # (S,  D)
    V = jnp.dot(xv, wv, preferred_element_type=f32) + bv      # (S,  D)

    Qb = Q.astype(bf16)
    Kb = K.astype(bf16)
    Vb = V.astype(bf16)

    # Per-head scaled-dot-product attention; static head loop, static slices,
    # contexts collected in registers (no scratch, no masked partial stores).
    ctxs = []
    for h in range(n_heads):
        sl = slice(h * d_k, (h + 1) * d_k)
        qh, kh, vh = Qb[:, sl], Kb[:, sl], Vb[:, sl]
        # Contract the shared d_k dim of Q and K directly (no K transpose).
        scores = lax.dot_general(qh, kh, (((1,), (1,)), ((), ())),
                                 preferred_element_type=f32)   # (tq, S)
        m = scores.max(axis=-1, keepdims=True)                 # f32 stats
        p = jnp.exp(scores - m)
        p = p * pl.reciprocal(p.sum(axis=-1, keepdims=True), approx=True)
        ctxs.append(jnp.dot(p.astype(bf16), vh,
                            preferred_element_type=f32))       # (tq, d_k)

    ctx = jnp.concatenate(ctxs, axis=-1).astype(bf16)          # (tq, D)

    # Merged output projection + bias; one lane-dense store per grid step.
    out = jnp.dot(ctx, wo, preferred_element_type=f32) + bo
    o_ref[0] = out.astype(o_ref.dtype)


def multi_headed_attention(q, k, v, params, n_heads, *, block_q=128):
    """params: dict with Wq,bq,Wk,bk,Wv,bv,Wo,bo (PyTorch Linear convention)."""
    B, S, D = q.shape
    assert D % n_heads == 0
    d_k = D // n_heads
    scale = 1.0 / math.sqrt(d_k)

    # Host-side weight prep: pre-transpose (y = x @ W.T -> x @ WT), fold the
    # attention scale into the Q projection, pack all weights into one bf16
    # block and all biases into one f32 block.
    w_all = jnp.concatenate(
        [params["Wq"].T * scale, params["Wk"].T, params["Wv"].T, params["Wo"].T],
        axis=1).astype(jnp.bfloat16)                              # (D, 4D)
    b_all = jnp.concatenate(
        [params["bq"] * scale, params["bk"], params["bv"], params["bo"]],
        axis=0).reshape(1, 4 * D).astype(jnp.float32)             # (1, 4D)

    # bf16 activations: halves input DMA bytes / VMEM residency.
    qb = q.astype(jnp.bfloat16)
    kb = k.astype(jnp.bfloat16)
    vb = v.astype(jnp.bfloat16)

    block_q = min(block_q, S)
    assert S % block_q == 0, "S must be divisible by the query tile"
    grid = (B, S // block_q)

    kernel = functools.partial(_mha_kernel, n_heads=n_heads, d_k=d_k,
                               d_model=D)

    q_spec = pl.BlockSpec((1, block_q, D), lambda b, qi: (b, qi, 0))
    kv_spec = pl.BlockSpec((1, S, D), lambda b, qi: (b, 0, 0))
    w_spec = pl.BlockSpec((D, 4 * D), lambda b, qi: (0, 0))   # constant -> loaded once
    b_spec = pl.BlockSpec((1, 4 * D), lambda b, qi: (0, 0))
    o_spec = pl.BlockSpec((1, block_q, D), lambda b, qi: (b, qi, 0))

    return pl.pallas_call(
        kernel,
        out_shape=jax.ShapeDtypeStruct((B, S, D), jnp.float32),
        grid_spec=pltpu.PrefetchScalarGridSpec(
            num_scalar_prefetch=0,
            grid=grid,
            in_specs=[q_spec, kv_spec, kv_spec, w_spec, b_spec],
            out_specs=o_spec,
        ),
        compiler_params=pltpu.CompilerParams(
            dimension_semantics=("parallel", "parallel"),
            vmem_limit_bytes=48 * 1024 * 1024,   # explicit budget (v7x: 64 MiB phys)
        ),
    )(qb, kb, vb, w_all, b_all)


def reference_mha(q, k, v, params, n_heads):
    """Pure-JAX reference replicating the PyTorch forward (eval mode), f32."""
    B, S, D = q.shape
    d_k = D // n_heads

    def lin(x, W, b):
        return x @ W.T + b

    def split(x):
        return x.reshape(B, S, n_heads, d_k).transpose(0, 2, 1, 3)  # (B,H,S,d_k)

    Q = split(lin(q, params["Wq"], params["bq"]))
    K = split(lin(k, params["Wk"], params["bk"]))
    V = split(lin(v, params["Wv"], params["bv"]))

    scores = jnp.einsum("bhqd,bhkd->bhqk", Q, K) / math.sqrt(d_k)
    p = jax.nn.softmax(scores, axis=-1)
    ctx = jnp.einsum("bhqk,bhkd->bhqd", p, V)                # (B,H,S,d_k)
    ctx = ctx.transpose(0, 2, 1, 3).reshape(B, S, D)
    return lin(ctx, params["Wo"], params["bo"])


if __name__ == "__main__":
    B, S, D, H = 2, 8, 32, 4

    key = jax.random.PRNGKey(0)
    keys = jax.random.split(key, 11)
    bound = 1.0 / math.sqrt(D)  # nn.Linear default init range

    params = {
        "Wq": jax.random.uniform(keys[0], (D, D), jnp.float32, -bound, bound),
        "bq": jax.random.uniform(keys[1], (D,), jnp.float32, -bound, bound),
        "Wk": jax.random.uniform(keys[2], (D, D), jnp.float32, -bound, bound),
        "bk": jax.random.uniform(keys[3], (D,), jnp.float32, -bound, bound),
        "Wv": jax.random.uniform(keys[4], (D, D), jnp.float32, -bound, bound),
        "bv": jax.random.uniform(keys[5], (D,), jnp.float32, -bound, bound),
        "Wo": jax.random.uniform(keys[6], (D, D), jnp.float32, -bound, bound),
        "bo": jax.random.uniform(keys[7], (D,), jnp.float32, -bound, bound),
    }

    q = jax.random.normal(keys[8], (B, S, D), jnp.float32)
    k = jax.random.normal(keys[9], (B, S, D), jnp.float32)
    v = jax.random.normal(keys[10], (B, S, D), jnp.float32)

    out = multi_headed_attention(q, k, v, params, H)
    out = jax.block_until_ready(out)

    ref = reference_mha(q, k, v, params, H)
    assert out.shape == (B, S, D)
    # Tolerance relaxed for bf16 activations/weights on the MXU + approx
    # reciprocal in the softmax denominator (f32 reference).
    assert jnp.allclose(out, ref, atol=5e-2, rtol=5e-2), (
        f"max abs err {jnp.max(jnp.abs(out - ref))}")

    print("KERNEL_OK")
</pallas_src>

<mosaic_0001>
module attributes {stable_mosaic.version = 11 : i64} {
  func.func @_mha_kernel(%arg0: i32, %arg1: i32, %arg2: memref<1x8x32xbf16, #tpu.memory_space<vmem>>, %arg3: memref<1x8x32xbf16, #tpu.memory_space<vmem>>, %arg4: memref<1x8x32xbf16, #tpu.memory_space<vmem>>, %arg5: memref<32x128xbf16, #tpu.memory_space<vmem>>, %arg6: memref<1x128xf32, #tpu.memory_space<vmem>>, %arg7: memref<1x8x32xf32, #tpu.memory_space<vmem>>) attributes {dimension_semantics = [#tpu.dimension_semantics<parallel>, #tpu.dimension_semantics<parallel>], iteration_bounds = array<i64: 2, 1>, scalar_prefetch = 0 : i64, scratch_operands = 0 : i64, tpu.core_type = #tpu.core_type<tc>, window_params = [{transform_indices = @transform_0, window_bounds = array<i64: 1, 8, 32>}, {transform_indices = @transform_1, window_bounds = array<i64: 1, 8, 32>}, {transform_indices = @transform_2, window_bounds = array<i64: 1, 8, 32>}, {pipeline_mode = #tpu.pipeline_mode<synchronous>, transform_indices = @transform_3, window_bounds = array<i64: 32, 128>}, {pipeline_mode = #tpu.pipeline_mode<synchronous>, transform_indices = @transform_4, window_bounds = array<i64: 1, 128>}, {transform_indices = @transform_5, window_bounds = array<i64: 1, 8, 32>}]} {
    %c0 = arith.constant 0 : index
    %c0_0 = arith.constant 0 : index
    %c0_1 = arith.constant 0 : index
    %0 = vector.load %arg2[%c0, %c0_0, %c0_1] : memref<1x8x32xbf16, #tpu.memory_space<vmem>>, vector<1x8x32xbf16>
    %1 = vector.shape_cast %0 : vector<1x8x32xbf16> to vector<8x32xbf16>
    %c0_2 = arith.constant 0 : index
    %c0_3 = arith.constant 0 : index
    %c0_4 = arith.constant 0 : index
    %2 = vector.load %arg3[%c0_2, %c0_3, %c0_4] : memref<1x8x32xbf16, #tpu.memory_space<vmem>>, vector<1x8x32xbf16>
    %3 = vector.shape_cast %2 : vector<1x8x32xbf16> to vector<8x32xbf16>
    %c0_5 = arith.constant 0 : index
    %c0_6 = arith.constant 0 : index
    %c0_7 = arith.constant 0 : index
    %4 = vector.load %arg4[%c0_5, %c0_6, %c0_7] : memref<1x8x32xbf16, #tpu.memory_space<vmem>>, vector<1x8x32xbf16>
    %5 = vector.shape_cast %4 : vector<1x8x32xbf16> to vector<8x32xbf16>
    %c0_8 = arith.constant 0 : index
    %c0_9 = arith.constant 0 : index
    %6 = vector.load %arg5[%c0_8, %c0_9] : memref<32x128xbf16, #tpu.memory_space<vmem>>, vector<32x128xbf16>
    %c0_10 = arith.constant 0 : index
    %c0_11 = arith.constant 0 : index
    %7 = vector.load %arg6[%c0_10, %c0_11] : memref<1x128xf32, #tpu.memory_space<vmem>>, vector<1x128xf32>
    %8 = vector.extract_strided_slice %6 {offsets = [0, 0], sizes = [32, 32], strides = [1, 1]} : vector<32x128xbf16> to vector<32x32xbf16>
    %9 = vector.extract_strided_slice %6 {offsets = [0, 32], sizes = [32, 32], strides = [1, 1]} : vector<32x128xbf16> to vector<32x32xbf16>
    %10 = vector.extract_strided_slice %6 {offsets = [0, 64], sizes = [32, 32], strides = [1, 1]} : vector<32x128xbf16> to vector<32x32xbf16>
    %11 = vector.extract_strided_slice %6 {offsets = [0, 96], sizes = [32, 32], strides = [1, 1]} : vector<32x128xbf16> to vector<32x32xbf16>
    %12 = vector.extract_strided_slice %7 {offsets = [0, 0], sizes = [1, 32], strides = [1, 1]} : vector<1x128xf32> to vector<1x32xf32>
    %13 = vector.extract_strided_slice %7 {offsets = [0, 32], sizes = [1, 32], strides = [1, 1]} : vector<1x128xf32> to vector<1x32xf32>
    %14 = vector.extract_strided_slice %7 {offsets = [0, 64], sizes = [1, 32], strides = [1, 1]} : vector<1x128xf32> to vector<1x32xf32>
    %15 = vector.extract_strided_slice %7 {offsets = [0, 96], sizes = [1, 32], strides = [1, 1]} : vector<1x128xf32> to vector<1x32xf32>
    %cst = arith.constant dense<0.000000e+00> : vector<8x32xf32>
    %16 = tpu.matmul %1, %8, %cst {dimension_numbers = #tpu.dot_dimension_numbers<[1], [0], [0], [1], [0, 0, 1, 1], [], []>} : vector<8x32xbf16>, vector<32x32xbf16>, vector<8x32xf32> -> vector<8x32xf32>
    %17 = vector.broadcast %12 : vector<1x32xf32> to vector<8x32xf32>
    %18 = arith.addf %16, %17 : vector<8x32xf32>
    %cst_12 = arith.constant dense<0.000000e+00> : vector<8x32xf32>
    %19 = tpu.matmul %3, %9, %cst_12 {dimension_numbers = #tpu.dot_dimension_numbers<[1], [0], [0], [1], [0, 0, 1, 1], [], []>} : vector<8x32xbf16>, vector<32x32xbf16>, vector<8x32xf32> -> vector<8x32xf32>
    %20 = vector.broadcast %13 : vector<1x32xf32> to vector<8x32xf32>
    %21 = arith.addf %19, %20 : vector<8x32xf32>
    %cst_13 = arith.constant dense<0.000000e+00> : vector<8x32xf32>
    %22 = tpu.matmul %5, %10, %cst_13 {dimension_numbers = #tpu.dot_dimension_numbers<[1], [0], [0], [1], [0, 0, 1, 1], [], []>} : vector<8x32xbf16>, vector<32x32xbf16>, vector<8x32xf32> -> vector<8x32xf32>
    %23 = vector.broadcast %14 : vector<1x32xf32> to vector<8x32xf32>
    %24 = arith.addf %22, %23 : vector<8x32xf32>
    %25 = arith.truncf %18 : vector<8x32xf32> to vector<8x32xbf16>
    %26 = arith.truncf %21 : vector<8x32xf32> to vector<8x32xbf16>
    %27 = arith.truncf %24 : vector<8x32xf32> to vector<8x32xbf16>
    %28 = vector.extract_strided_slice %25 {offsets = [0, 0], sizes = [8, 8], strides = [1, 1]} : vector<8x32xbf16> to vector<8x8xbf16>
    %29 = vector.extract_strided_slice %26 {offsets = [0, 0], sizes = [8, 8], strides = [1, 1]} : vector<8x32xbf16> to vector<8x8xbf16>
    %30 = vector.extract_strided_slice %27 {offsets = [0, 0], sizes = [8, 8], strides = [1, 1]} : vector<8x32xbf16> to vector<8x8xbf16>
    %cst_14 = arith.constant dense<0.000000e+00> : vector<8x8xf32>
    %31 = tpu.matmul %28, %29, %cst_14 {dimension_numbers = #tpu.dot_dimension_numbers<[1], [1], [0], [0], [0, 0, 1, 0], [], []>} : vector<8x8xbf16>, vector<8x8xbf16>, vector<8x8xf32> -> vector<8x8xf32>
    %cst_15 = arith.constant dense<0xFF800000> : vector<8xf32>
    %32 = vector.multi_reduction <maximumf>, %31, %cst_15 [1] : vector<8x8xf32> to vector<8xf32>
    %33 = vector.shape_cast %32 : vector<8xf32> to vector<8x1xf32>
    %34 = vector.broadcast %33 : vector<8x1xf32> to vector<8x8xf32>
    %35 = arith.subf %31, %34 : vector<8x8xf32>
    %36 = math.exp %35 : vector<8x8xf32>
    %cst_16 = arith.constant dense<0.000000e+00> : vector<8xf32>
    %37 = vector.multi_reduction <add>, %36, %cst_16 [1] : vector<8x8xf32> to vector<8xf32>
    %38 = vector.shape_cast %37 : vector<8xf32> to vector<8x1xf32>
    %39 = tpu.reciprocal %38 {approx = true} : vector<8x1xf32> -> vector<8x1xf32>
    %40 = vector.broadcast %39 : vector<8x1xf32> to vector<8x8xf32>
    %41 = arith.mulf %36, %40 : vector<8x8xf32>
    %42 = arith.truncf %41 : vector<8x8xf32> to vector<8x8xbf16>
    %cst_17 = arith.constant dense<0.000000e+00> : vector<8x8xf32>
    %43 = tpu.matmul %42, %30, %cst_17 {dimension_numbers = #tpu.dot_dimension_numbers<[1], [0], [0], [1], [0, 0, 1, 1], [], []>} : vector<8x8xbf16>, vector<8x8xbf16>, vector<8x8xf32> -> vector<8x8xf32>
    %44 = vector.extract_strided_slice %25 {offsets = [0, 8], sizes = [8, 8], strides = [1, 1]} : vector<8x32xbf16> to vector<8x8xbf16>
    %45 = vector.extract_strided_slice %26 {offsets = [0, 8], sizes = [8, 8], strides = [1, 1]} : vector<8x32xbf16> to vector<8x8xbf16>
    %46 = vector.extract_strided_slice %27 {offsets = [0, 8], sizes = [8, 8], strides = [1, 1]} : vector<8x32xbf16> to vector<8x8xbf16>
    %cst_18 = arith.constant dense<0.000000e+00> : vector<8x8xf32>
    %47 = tpu.matmul %44, %45, %cst_18 {dimension_numbers = #tpu.dot_dimension_numbers<[1], [1], [0], [0], [0, 0, 1, 0], [], []>} : vector<8x8xbf16>, vector<8x8xbf16>, vector<8x8xf32> -> vector<8x8xf32>
    %cst_19 = arith.constant dense<0xFF800000> : vector<8xf32>
    %48 = vector.multi_reduction <maximumf>, %47, %cst_19 [1] : vector<8x8xf32> to vector<8xf32>
    %49 = vector.shape_cast %48 : vector<8xf32> to vector<8x1xf32>
    %50 = vector.broadcast %49 : vector<8x1xf32> to vector<8x8xf32>
    %51 = arith.subf %47, %50 : vector<8x8xf32>
    %52 = math.exp %51 : vector<8x8xf32>
    %cst_20 = arith.constant dense<0.000000e+00> : vector<8xf32>
    %53 = vector.multi_reduction <add>, %52, %cst_20 [1] : vector<8x8xf32> to vector<8xf32>
    %54 = vector.shape_cast %53 : vector<8xf32> to vector<8x1xf32>
    %55 = tpu.reciprocal %54 {approx = true} : vector<8x1xf32> -> vector<8x1xf32>
    %56 = vector.broadcast %55 : vector<8x1xf32> to vector<8x8xf32>
    %57 = arith.mulf %52, %56 : vector<8x8xf32>
    %58 = arith.truncf %57 : vector<8x8xf32> to vector<8x8xbf16>
    %cst_21 = arith.constant dense<0.000000e+00> : vector<8x8xf32>
    %59 = tpu.matmul %58, %46, %cst_21 {dimension_numbers = #tpu.dot_dimension_numbers<[1], [0], [0], [1], [0, 0, 1, 1], [], []>} : vector<8x8xbf16>, vector<8x8xbf16>, vector<8x8xf32> -> vector<8x8xf32>
    %60 = vector.extract_strided_slice %25 {offsets = [0, 16], sizes = [8, 8], strides = [1, 1]} : vector<8x32xbf16> to vector<8x8xbf16>
    %61 = vector.extract_strided_slice %26 {offsets = [0, 16], sizes = [8, 8], strides = [1, 1]} : vector<8x32xbf16> to vector<8x8xbf16>
    %62 = vector.extract_strided_slice %27 {offsets = [0, 16], sizes = [8, 8], strides = [1, 1]} : vector<8x32xbf16> to vector<8x8xbf16>
    %cst_22 = arith.constant dense<0.000000e+00> : vector<8x8xf32>
    %63 = tpu.matmul %60, %61, %cst_22 {dimension_numbers = #tpu.dot_dimension_numbers<[1], [1], [0], [0], [0, 0, 1, 0], [], []>} : vector<8x8xbf16>, vector<8x8xbf16>, vector<8x8xf32> -> vector<8x8xf32>
    %cst_23 = arith.constant dense<0xFF800000> : vector<8xf32>
    %64 = vector.multi_reduction <maximumf>, %63, %cst_23 [1] : vector<8x8xf32> to vector<8xf32>
    %65 = vector.shape_cast %64 : vector<8xf32> to vector<8x1xf32>
    %66 = vector.broadcast %65 : vector<8x1xf32> to vector<8x8xf32>
    %67 = arith.subf %63, %66 : vector<8x8xf32>
    %68 = math.exp %67 : vector<8x8xf32>
    %cst_24 = arith.constant dense<0.000000e+00> : vector<8xf32>
    %69 = vector.multi_reduction <add>, %68, %cst_24 [1] : vector<8x8xf32> to vector<8xf32>
    %70 = vector.shape_cast %69 : vector<8xf32> to vector<8x1xf32>
    %71 = tpu.reciprocal %70 {approx = true} : vector<8x1xf32> -> vector<8x1xf32>
    %72 = vector.broadcast %71 : vector<8x1xf32> to vector<8x8xf32>
    %73 = arith.mulf %68, %72 : vector<8x8xf32>
    %74 = arith.truncf %73 : vector<8x8xf32> to vector<8x8xbf16>
    %cst_25 = arith.constant dense<0.000000e+00> : vector<8x8xf32>
    %75 = tpu.matmul %74, %62, %cst_25 {dimension_numbers = #tpu.dot_dimension_numbers<[1], [0], [0], [1], [0, 0, 1, 1], [], []>} : vector<8x8xbf16>, vector<8x8xbf16>, vector<8x8xf32> -> vector<8x8xf32>
    %76 = vector.extract_strided_slice %25 {offsets = [0, 24], sizes = [8, 8], strides = [1, 1]} : vector<8x32xbf16> to vector<8x8xbf16>
    %77 = vector.extract_strided_slice %26 {offsets = [0, 24], sizes = [8, 8], strides = [1, 1]} : vector<8x32xbf16> to vector<8x8xbf16>
    %78 = vector.extract_strided_slice %27 {offsets = [0, 24], sizes = [8, 8], strides = [1, 1]} : vector<8x32xbf16> to vector<8x8xbf16>
    %cst_26 = arith.constant dense<0.000000e+00> : vector<8x8xf32>
    %79 = tpu.matmul %76, %77, %cst_26 {dimension_numbers = #tpu.dot_dimension_numbers<[1], [1], [0], [0], [0, 0, 1, 0], [], []>} : vector<8x8xbf16>, vector<8x8xbf16>, vector<8x8xf32> -> vector<8x8xf32>
    %cst_27 = arith.constant dense<0xFF800000> : vector<8xf32>
    %80 = vector.multi_reduction <maximumf>, %79, %cst_27 [1] : vector<8x8xf32> to vector<8xf32>
    %81 = vector.shape_cast %80 : vector<8xf32> to vector<8x1xf32>
    %82 = vector.broadcast %81 : vector<8x1xf32> to vector<8x8xf32>
    %83 = arith.subf %79, %82 : vector<8x8xf32>
    %84 = math.exp %83 : vector<8x8xf32>
    %cst_28 = arith.constant dense<0.000000e+00> : vector<8xf32>
    %85 = vector.multi_reduction <add>, %84, %cst_28 [1] : vector<8x8xf32> to vector<8xf32>
    %86 = vector.shape_cast %85 : vector<8xf32> to vector<8x1xf32>
    %87 = tpu.reciprocal %86 {approx = true} : vector<8x1xf32> -> vector<8x1xf32>
    %88 = vector.broadcast %87 : vector<8x1xf32> to vector<8x8xf32>
    %89 = arith.mulf %84, %88 : vector<8x8xf32>
    %90 = arith.truncf %89 : vector<8x8xf32> to vector<8x8xbf16>
    %cst_29 = arith.constant dense<0.000000e+00> : vector<8x8xf32>
    %91 = tpu.matmul %90, %78, %cst_29 {dimension_numbers = #tpu.dot_dimension_numbers<[1], [0], [0], [1], [0, 0, 1, 1], [], []>} : vector<8x8xbf16>, vector<8x8xbf16>, vector<8x8xf32> -> vector<8x8xf32>
    %92 = tpu.concatenate %43, %59, %75, %91 in 1 : vector<8x8xf32>, vector<8x8xf32>, vector<8x8xf32>, vector<8x8xf32> -> vector<8x32xf32>
    %93 = arith.truncf %92 : vector<8x32xf32> to vector<8x32xbf16>
    %cst_30 = arith.constant dense<0.000000e+00> : vector<8x32xf32>
    %94 = tpu.matmul %93, %11, %cst_30 {dimension_numbers = #tpu.dot_dimension_numbers<[1], [0], [0], [1], [0, 0, 1, 1], [], []>} : vector<8x32xbf16>, vector<32x32xbf16>, vector<8x32xf32> -> vector<8x32xf32>
    %95 = vector.broadcast %15 : vector<1x32xf32> to vector<8x32xf32>
    %96 = arith.addf %94, %95 : vector<8x32xf32>
    %c0_31 = arith.constant 0 : index
    %c0_32 = arith.constant 0 : index
    %c0_33 = arith.constant 0 : index
    %97 = vector.load %arg7[%c0_31, %c0_32, %c0_33] : memref<1x8x32xf32, #tpu.memory_space<vmem>>, vector<1x8x32xf32>
    %98 = vector.shape_cast %97 : vector<1x8x32xf32> to vector<8x32xf32>
    %99 = vector.shape_cast %96 : vector<8x32xf32> to vector<1x8x32xf32>
    tpu.vector_store %arg7[%c0_31, %c0_32, %c0_33], %99 {strides = array<i32>} : memref<1x8x32xf32, #tpu.memory_space<vmem>>, vector<1x8x32xf32>,
    return
  }
  func.func @transform_0(%arg0: i32, %arg1: i32) -> (i32, i32, i32) {
    %c0_i32 = arith.constant 0 : i32
    %c0_i32_0 = arith.constant 0 : i32
    return %arg0, %arg1, %c0_i32 : i32, i32, i32
  }
  func.func @transform_1(%arg0: i32, %arg1: i32) -> (i32, i32, i32) {
    %c0_i32 = arith.constant 0 : i32
    %c0_i32_0 = arith.constant 0 : i32
    %c0_i32_1 = arith.constant 0 : i32
    return %arg0, %c0_i32, %c0_i32_0 : i32, i32, i32
  }
  func.func @transform_2(%arg0: i32, %arg1: i32) -> (i32, i32, i32) {
    %c0_i32 = arith.constant 0 : i32
    %c0_i32_0 = arith.constant 0 : i32
    %c0_i32_1 = arith.constant 0 : i32
    return %arg0, %c0_i32, %c0_i32_0 : i32, i32, i32
  }
  func.func @transform_3(%arg0: i32, %arg1: i32) -> (i32, i32) {
    %c0_i32 = arith.constant 0 : i32
    %c0_i32_0 = arith.constant 0 : i32
    %c0_i32_1 = arith.constant 0 : i32
    return %c0_i32, %c0_i32_0 : i32, i32
  }
  func.func @transform_4(%arg0: i32, %arg1: i32) -> (i32, i32) {
    %c0_i32 = arith.constant 0 : i32
    %c0_i32_0 = arith.constant 0 : i32
    %c0_i32_1 = arith.constant 0 : i32
    return %c0_i32, %c0_i32_0 : i32, i32
  }
  func.func @transform_5(%arg0: i32, %arg1: i32) -> (i32, i32, i32) {
    %c0_i32 = arith.constant 0 : i32
    %c0_i32_0 = arith.constant 0 : i32
    return %arg0, %arg1, %c0_i32 : i32, i32, i32
  }
}

</mosaic_0001>

<llo_original>
// kernel: tpu_custom_call.1
$region0: #{tpu_custom_call.1}
  #allocation0 [shape = 'u32[]', space=smem, size = 0x4, offset = 0x4, fixed_abs, tag = 'smem constant byte address 0x4 - core index']
  #allocation1 [shape = 'u32[72,128]{1,0:T(1,128)}', space=vmem, size = 0x9000, scoped, tag = 'internal scratch']
  %s0 = inlined_call_operand.hbm [shape: bf16[2,8,32], index: 0, kind: input, shape index: {}]
  %s1 = inlined_call_operand.hbm [shape: bf16[2,8,32], index: 1, kind: input, shape index: {}]
  %s2 = inlined_call_operand.hbm [shape: bf16[2,8,32], index: 2, kind: input, shape index: {}]
  %s3 = inlined_call_operand.hbm [shape: bf16[32,128], index: 3, kind: input, shape index: {}]
  %s4 = inlined_call_operand.vmem [shape: f32[1,128], index: 4, kind: input, shape index: {}]
  %s5 = inlined_call_operand.hbm [shape: f32[2,8,32], index: 5, kind: output, shape index: {}]
  %s6 = sld [smem:[#allocation0]]
  $region69: #{tpu_custom_call.1} parent=0
    _
  %s8 = ssub.s32 1, %s6
  %s9 = scalar_select 0, %s8, %s6
  $region1: #{tpu_custom_call.1} parent=0
    #allocation2 [shape = 'u8[4096]{0}', space=vmem, size = 0x1000, scoped, tag = 'input window, operand 0']
    #allocation3 [shape = 's32[2]{0}', space=sflag, size = 0x8, scoped, tag = 'scoped memory for tpu_custom_call.1']
    #allocation4 [shape = 's32[2]{0}', space=sflag, size = 0x8, scoped, tag = 'scoped memory for tpu_custom_call.1']
    #allocation5 [shape = 'u8[4096]{0}', space=vmem, size = 0x1000, scoped, tag = 'input window, operand 1']
    #allocation6 [shape = 's32[2]{0}', space=sflag, size = 0x8, scoped, tag = 'scoped memory for tpu_custom_call.1']
    #allocation7 [shape = 'u8[4096]{0}', space=vmem, size = 0x1000, scoped, tag = 'input window, operand 2']
    #allocation8 [shape = 'u8[8192]{0}', space=vmem, size = 0x2000, scoped, tag = 'input window, operand 3, single buffered']
    #allocation9 [shape = 's32[1]{0}', space=sflag, size = 0x4, scoped, tag = 'scoped memory for tpu_custom_call.1']
    #allocation10 [shape = 'u8[8192]{0}', space=vmem, size = 0x2000, scoped, tag = 'output window, operand 0']
    %10 = vsyncpa [#allocation3], 0
    %s11 = scalar_lea.sflag [#allocation3], 1
    %12 = vsyncpa %s11, 0
    %13 = vsyncpa [#allocation6], 0
    %s14 = scalar_lea.sflag [#allocation6], 1
    %15 = vsyncpa %s14, 0
    %16 = vsyncpa [#allocation9], 0
    %17 = vsyncpa [#allocation4], 0
    %s18 = scalar_lea.sflag [#allocation4], 1
    %19 = vsyncpa %s18, 0
    loop: start=0, step=1, limit=4
    $region2: #{tpu_custom_call.1} parent=1 // loop_pre_header
      _
    $region3: #{tpu_custom_call.1} parent=1 // loop_header
      %s21 = sphi 0, %s25
      %p22 = scmp.ge.s32.totalorder %s21, 4
      %s28 = sphi 0, %s40
      %s29 = sphi 0, %s36
      %s30 = sphi 0, %s28
      %s31 = sphi 0, %s29
      %s32 = sphi 0, %s30
      %s33 = sphi 0, %s31
      %s45 = sphi 0, %s47
      %s48 = sphi 0, %s45
      %s49 = sphi 0, %s48
      %s65 = sphi 0, %s49
      %s71 = sphi 0, %s73
      %s74 = sphi 0, %s71
      %s75 = sphi 0, %s74
      %s91 = sphi 0, %s75
      %s97 = sphi 0, %s99
      %s100 = sphi 0, %s97
      %s101 = sphi 0, %s100
      %s117 = sphi 0, %s101
      %s121 = sphi 0, %s121
      %s123 = sphi 0, %s121
      %s124 = sphi 0, %s123
      %s138 = sphi 0, %s124
      %s142 = sphi 0, %s142
      %s144 = sphi 0, %s142
      %s145 = sphi 0, %s144
      %s159 = sphi 0, %s145
      %s167 = sphi 0, %s169
      %s170 = sphi 0, %s167
      %s171 = sphi 0, %s170
      %s187 = sphi 0, %s171
    $region4: #{tpu_custom_call.1} parent=1 // loop_header_branch
      %24 = sbr.rel (%p22) target = $region8
    $region5: #{tpu_custom_call.1} parent=1 // loop_body
      %s26 = ssub.s32 %s21, 1
      %s27 = ssub.s32 %s21, 2
      %s34 = sadd.s32 1, %s29
      %p35 = scmp.ge.s32.totalorder %s34, 1
      %s36 = scalar_select %p35, 0, %s34
      %s37 = sadd.s32 1, %s28
      %s38 = scalar_select %p35, %s37, %s28
      %p39 = scmp.ge.s32.totalorder %s38, 2
      %s40 = scalar_select %p39, 0, %s38
      %s41 = ssub.s32 %s28, %s40
      %s42 = ssub.s32 %s29, %s36
      %s43 = sor.u32 %s41, %s42
      %p44 = scmp.eq.s32.totalorder %s43, 0
      %s46 = sadd.s32 %s45, 1
      %s47 = scalar_select %p44, %s45, %s46
      %p50 = pneg %p44
      %p51 = scmp.eq.s32.totalorder %s21, 1
      %p52 = por %p50, %p51
      %p53 = scmp.ne.s32.totalorder %s45, %s48
      %p54 = scmp.eq.s32.totalorder %s21, 0
      %p55 = por %p53, %p54
      %p56 = scmp.ne.s32.totalorder %s45, %s48
      %p57 = scmp.eq.s32.totalorder %s26, 1
      %p58 = por %p56, %p57
      %p59 = scmp.ne.s32.totalorder %s48, %s49
      %p60 = scmp.eq.s32.totalorder %s26, 0
      %p61 = por %p59, %p60
      %p62 = scmp.ne.s32.totalorder %s48, %s49
      %p63 = scmp.eq.s32.totalorder %s27, 1
      %p64 = por %p62, %p63
      %p66 = scmp.ne.s32.totalorder %s49, %s65
      %p67 = scmp.eq.s32.totalorder %s27, 0
      %p68 = por %p66, %p67
      %s69 = ssub.s32 %s28, %s40
      %p70 = scmp.eq.s32.totalorder %s69, 0
      %s72 = sadd.s32 %s71, 1
      %s73 = scalar_select %p70, %s71, %s72
      %p76 = pneg %p70
      %p77 = scmp.eq.s32.totalorder %s21, 1
      %p78 = por %p76, %p77
      %p79 = scmp.ne.s32.totalorder %s71, %s74
      %p80 = scmp.eq.s32.totalorder %s21, 0
      %p81 = por %p79, %p80
      %p82 = scmp.ne.s32.totalorder %s71, %s74
      %p83 = scmp.eq.s32.totalorder %s26, 1
      %p84 = por %p82, %p83
      %p85 = scmp.ne.s32.totalorder %s74, %s75
      %p86 = scmp.eq.s32.totalorder %s26, 0
      %p87 = por %p85, %p86
      %p88 = scmp.ne.s32.totalorder %s74, %s75
      %p89 = scmp.eq.s32.totalorder %s27, 1
      %p90 = por %p88, %p89
      %p92 = scmp.ne.s32.totalorder %s75, %s91
      %p93 = scmp.eq.s32.totalorder %s27, 0
      %p94 = por %p92, %p93
      %s95 = ssub.s32 %s28, %s40
      %p96 = scmp.eq.s32.totalorder %s95, 0
      %s98 = sadd.s32 %s97, 1
      %s99 = scalar_select %p96, %s97, %s98
      %p102 = pneg %p96
      %p103 = scmp.eq.s32.totalorder %s21, 1
      %p104 = por %p102, %p103
      %p105 = scmp.ne.s32.totalorder %s97, %s100
      %p106 = scmp.eq.s32.totalorder %s21, 0
      %p107 = por %p105, %p106
      %p108 = scmp.ne.s32.totalorder %s97, %s100
      %p109 = scmp.eq.s32.totalorder %s26, 1
      %p110 = por %p108, %p109
      %p111 = scmp.ne.s32.totalorder %s100, %s101
      %p112 = scmp.eq.s32.totalorder %s26, 0
      %p113 = por %p111, %p112
      %p114 = scmp.ne.s32.totalorder %s100, %s101
      %p115 = scmp.eq.s32.totalorder %s27, 1
      %p116 = por %p114, %p115
      %p118 = scmp.ne.s32.totalorder %s101, %s117
      %p119 = scmp.eq.s32.totalorder %s27, 0
      %p120 = por %p118, %p119
      %s122 = sadd.s32 %s121, 1
      %p125 = scmp.eq.s32.totalorder %s21, 1
      %p126 = scmp.ne.s32.totalorder %s121, %s123
      %p127 = scmp.eq.s32.totalorder %s21, 0
      %p128 = por %p126, %p127
      %p129 = scmp.ne.s32.totalorder %s121, %s123
      %p130 = scmp.eq.s32.totalorder %s26, 1
      %p131 = por %p129, %p130
      %p132 = scmp.ne.s32.totalorder %s123, %s124
      %p133 = scmp.eq.s32.totalorder %s26, 0
      %p134 = por %p132, %p133
      %p135 = scmp.ne.s32.totalorder %s123, %s124
      %p136 = scmp.eq.s32.totalorder %s27, 1
      %p137 = por %p135, %p136
      %p139 = scmp.ne.s32.totalorder %s124, %s138
      %p140 = scmp.eq.s32.totalorder %s27, 0
      %p141 = por %p139, %p140
      %s143 = sadd.s32 %s142, 1
      %p146 = scmp.eq.s32.totalorder %s21, 1
      %p147 = scmp.ne.s32.totalorder %s142, %s144
      %p148 = scmp.eq.s32.totalorder %s21, 0
      %p149 = por %p147, %p148
      %p150 = scmp.ne.s32.totalorder %s142, %s144
      %p151 = scmp.eq.s32.totalorder %s26, 1
      %p152 = por %p150, %p151
      %p153 = scmp.ne.s32.totalorder %s144, %s145
      %p154 = scmp.eq.s32.totalorder %s26, 0
      %p155 = por %p153, %p154
      %p156 = scmp.ne.s32.totalorder %s144, %s145
      %p157 = scmp.eq.s32.totalorder %s27, 1
      %p158 = por %p156, %p157
      %p160 = scmp.ne.s32.totalorder %s145, %s159
      %p161 = scmp.eq.s32.totalorder %s27, 0
      %p162 = por %p160, %p161
      %s163 = ssub.s32 %s28, %s40
      %s164 = ssub.s32 %s29, %s36
      %s165 = sor.u32 %s163, %s164
      %p166 = scmp.eq.s32.totalorder %s165, 0
      %s168 = sadd.s32 %s167, 1
      %s169 = scalar_select %p166, %s167, %s168
      %p172 = pneg %p166
      %p173 = scmp.eq.s32.totalorder %s21, 1
      %p174 = por %p172, %p173
      %p175 = scmp.ne.s32.totalorder %s167, %s170
      %p176 = scmp.eq.s32.totalorder %s21, 0
      %p177 = por %p175, %p176
      %p178 = scmp.ne.s32.totalorder %s167, %s170
      %p179 = scmp.eq.s32.totalorder %s26, 1
      %p180 = por %p178, %p179
      %p181 = scmp.ne.s32.totalorder %s170, %s171
      %p182 = scmp.eq.s32.totalorder %s26, 0
      %p183 = por %p181, %p182
      %p184 = scmp.ne.s32.totalorder %s170, %s171
      %p185 = scmp.eq.s32.totalorder %s27, 1
      %p186 = por %p184, %p185
      %p188 = scmp.ne.s32.totalorder %s171, %s187
      %p189 = scmp.eq.s32.totalorder %s27, 0
      %p190 = por %p188, %p189
      %p191 = scmp.le.s32.totalorder 1, %s21
      %p192 = scmp.lt.s32.totalorder %s21, 3
      %p193 = pnand %p191, %p192
      %p194 = pneg %p193
      // Predicated region
      $region9: #{tpu_custom_call.1} parent=5 // pred_check
        _
      $region10: #{tpu_custom_call.1} parent=5 // pred_check_branch
        %196 = sbr.rel (%p193) target = $region12
      $region11: #{tpu_custom_call.1} parent=5 // pred_region
        %s197 = ssub.s32 %s21, 1
        // Predicated region
        $region13: #{tpu_custom_call.1} parent=11 // pred_check
          %p198 = pneg %p134
        $region14: #{tpu_custom_call.1} parent=11 // pred_check_branch
          %200 = sbr.rel (%p198) target = $region16
        $region15: #{tpu_custom_call.1} parent=11 // pred_region
          %202 = vsyncadd [#allocation9], 0
          %s203 = sshll.u32 %s3, 4
          %s204 = int_to_ptr.hbm [resolvable:$true] %s203
          %s205 = sshll.u32 [#allocation8], 4
          %s206 = int_to_ptr.vmem [resolvable:$true] %s205
          %211 = dma.hbm_to_vmem [thread:$0]  %s204, 256, %s206, [#allocation9], 64, 64, 4
        $region16: #{tpu_custom_call.1} parent=11 // pred_fallthru
          _
        // Predicated region
        $region17: #{tpu_custom_call.1} parent=11 // pred_check
          %p212 = pneg %p155
        $region18: #{tpu_custom_call.1} parent=11 // pred_check_branch
          %214 = sbr.rel (%p212) target = $region20
        $region19: #{tpu_custom_call.1} parent=11 // pred_region
          _
        $region20: #{tpu_custom_call.1} parent=11 // pred_fallthru
          _
      $region12: #{tpu_custom_call.1} parent=5 // pred_fallthru
        _
      %p215 = scmp.lt.s32.totalorder %s21, 2
      // Predicated region
      $region21: #{tpu_custom_call.1} parent=5 // pred_check
        %p216 = pneg %p215
      $region22: #{tpu_custom_call.1} parent=5 // pred_check_branch
        %218 = sbr.rel (%p216) target = $region24
      $region23: #{tpu_custom_call.1} parent=5 // pred_region
        // Predicated region
        $region25: #{tpu_custom_call.1} parent=23 // pred_check
          %p219 = pneg %p55
        $region26: #{tpu_custom_call.1} parent=23 // pred_check_branch
          %221 = sbr.rel (%p219) target = $region28
        $region27: #{tpu_custom_call.1} parent=23 // pred_region
          %s222 = sand.u32 %s45, 1
          %s223 = scalar_lea.sflag [#allocation3], %s222
          %s224 = sand.u32 %s45, 1
          %s225 = smul.addr %s224, 4
          %s226 = scalar_lea.vmem [#allocation2], %s225
          %228 = vsyncadd %s223, 0
          %s229 = sadd.s32 %s29, %s28
          %s230 = smul.addr %s229, 4
          %s231 = scalar_lea.hbm %s0, %s230
          %s233 = sshll.u32 %s231, 4
          %s234 = int_to_ptr.hbm [resolvable:$true] %s233
          %s235 = sshll.u32 %s226, 4
          %s236 = int_to_ptr.vmem [resolvable:$true] %s235
          %238 = dma.hbm_to_vmem [thread:$0]  %s234, 64, %s236, %s223
        $region28: #{tpu_custom_call.1} parent=23 // pred_fallthru
          _
        // Predicated region
        $region29: #{tpu_custom_call.1} parent=23 // pred_check
          %p239 = pneg %p81
        $region30: #{tpu_custom_call.1} parent=23 // pred_check_branch
          %241 = sbr.rel (%p239) target = $region32
        $region31: #{tpu_custom_call.1} parent=23 // pred_region
          %s242 = sand.u32 %s21, 1
          %s243 = scalar_lea.sflag [#allocation6], %s242
          %s244 = sand.u32 %s71, 1
          %s245 = smul.addr %s244, 4
          %s246 = scalar_lea.vmem [#allocation5], %s245
          %248 = vsyncadd %s243, 0
          %s249 = smul.addr %s28, 4
          %s250 = scalar_lea.hbm %s1, %s249
          %s252 = sshll.u32 %s250, 4
          %s253 = int_to_ptr.hbm [resolvable:$true] %s252
          %s254 = sshll.u32 %s246, 4
          %s255 = int_to_ptr.vmem [resolvable:$true] %s254
          %257 = dma.hbm_to_vmem [thread:$0]  %s253, 64, %s255, %s243
        $region32: #{tpu_custom_call.1} parent=23 // pred_fallthru
          _
        // Predicated region
        $region33: #{tpu_custom_call.1} parent=23 // pred_check
          %p258 = pneg %p107
        $region34: #{tpu_custom_call.1} parent=23 // pred_check_branch
          %260 = sbr.rel (%p258) target = $region36
        $region35: #{tpu_custom_call.1} parent=23 // pred_region
          %s261 = sand.u32 %s21, 1
          %s262 = scalar_lea.sflag [#allocation6], %s261
          %s263 = sand.u32 %s97, 1
          %s264 = smul.addr %s263, 4
          %s265 = scalar_lea.vmem [#allocation7], %s264
          %267 = vsyncadd %s262, 0
          %s268 = smul.addr %s28, 4
          %s269 = scalar_lea.hbm %s2, %s268
          %s271 = sshll.u32 %s269, 4
          %s272 = int_to_ptr.hbm [resolvable:$true] %s271
          %s273 = sshll.u32 %s265, 4
          %s274 = int_to_ptr.vmem [resolvable:$true] %s273
          %276 = dma.hbm_to_vmem [thread:$0]  %s272, 64, %s274, %s262
        $region36: #{tpu_custom_call.1} parent=23 // pred_fallthru
          _
      $region24: #{tpu_custom_call.1} parent=5 // pred_fallthru
        _
      %p277 = scmp.le.s32.totalorder 1, %s21
      %p278 = scmp.lt.s32.totalorder %s21, 3
      %p279 = pnand %p277, %p278
      %p280 = pneg %p279
      // Predicated region
      $region37: #{tpu_custom_call.1} parent=5 // pred_check
        _
      $region38: #{tpu_custom_call.1} parent=5 // pred_check_branch
        %282 = sbr.rel (%p279) target = $region40
      $region39: #{tpu_custom_call.1} parent=5 // pred_region
        %s283 = ssub.s32 %s21, 1
        %s284 = sand.u32 %s48, 1
        %s285 = scalar_lea.sflag [#allocation3], %s284
        %s286 = sand.u32 %s48, 1
        %s287 = smul.addr %s286, 4
        %s288 = scalar_lea.vmem [#allocation2], %s287
        // Predicated region
        $region41: #{tpu_custom_call.1} parent=39 // pred_check
          %p289 = pneg %p61
        $region42: #{tpu_custom_call.1} parent=39 // pred_check_branch
          %291 = sbr.rel (%p289) target = $region44
        $region43: #{tpu_custom_call.1} parent=39 // pred_region
          %293 = dma.done %s285, 64
        $region44: #{tpu_custom_call.1} parent=39 // pred_fallthru
          _
        %s294 = sand.u32 %s26, 1
        %s295 = scalar_lea.sflag [#allocation6], %s294
        %s296 = sand.u32 %s74, 1
        %s297 = smul.addr %s296, 4
        %s298 = scalar_lea.vmem [#allocation5], %s297
        // Predicated region
        $region45: #{tpu_custom_call.1} parent=39 // pred_check
          %p299 = pneg %p87
        $region46: #{tpu_custom_call.1} parent=39 // pred_check_branch
          %301 = sbr.rel (%p299) target = $region48
        $region47: #{tpu_custom_call.1} parent=39 // pred_region
          %303 = dma.done %s295, 64
        $region48: #{tpu_custom_call.1} parent=39 // pred_fallthru
          _
        %s304 = sand.u32 %s26, 1
        %s305 = scalar_lea.sflag [#allocation6], %s304
        %s306 = sand.u32 %s100, 1
        %s307 = smul.addr %s306, 4
        %s308 = scalar_lea.vmem [#allocation7], %s307
        // Predicated region
        $region49: #{tpu_custom_call.1} parent=39 // pred_check
          %p309 = pneg %p113
        $region50: #{tpu_custom_call.1} parent=39 // pred_check_branch
          %311 = sbr.rel (%p309) target = $region52
        $region51: #{tpu_custom_call.1} parent=39 // pred_region
          %313 = dma.done %s305, 64
        $region52: #{tpu_custom_call.1} parent=39 // pred_fallthru
          _
        // Predicated region
        $region53: #{tpu_custom_call.1} parent=39 // pred_check
          %p314 = pneg %p134
        $region54: #{tpu_custom_call.1} parent=39 // pred_check_branch
          %316 = sbr.rel (%p314) target = $region56
        $region55: #{tpu_custom_call.1} parent=39 // pred_region
          %318 = dma.done [#allocation9], 256
        $region56: #{tpu_custom_call.1} parent=39 // pred_fallthru
          _
        %s319 = sand.u32 %s48, 1
        %s320 = scalar_lea.sflag [#allocation3], %s319
        %s321 = sand.u32 %s48, 1
        %s322 = smul.addr %s321, 4
        %s323 = scalar_lea.vmem [#allocation2], %s322
        %p324 = pneg %p61
        %p325 = pneg %p58
        %s326 = sand.u32 %s26, 1
        %s327 = scalar_lea.sflag [#allocation6], %s326
        %s328 = sand.u32 %s74, 1
        %s329 = smul.addr %s328, 4
        %s330 = scalar_lea.vmem [#allocation5], %s329
        %p331 = pneg %p87
        %p332 = pneg %p84
        %s333 = sand.u32 %s26, 1
        %s334 = scalar_lea.sflag [#allocation6], %s333
        %s335 = sand.u32 %s100, 1
        %s336 = smul.addr %s335, 4
        %s337 = scalar_lea.vmem [#allocation7], %s336
        %p338 = pneg %p113
        %p339 = pneg %p110
        %p340 = pneg %p134
        %p341 = pneg %p131
        %p342 = pneg %p155
        %p343 = pneg %p152
        %p344 = pneg %p183
        %p345 = pneg %p180
        %s346 = sand.u32 %s170, 1
        %s347 = scalar_lea.sflag [#allocation4], %s346
        %s348 = sand.u32 %s170, 1
        %s349 = smul.addr %s348, 8
        %s350 = scalar_lea.vmem [#allocation10], %s349
        %v352 = vld [vmem:[%s288] sm:$0xf]
        %v353 = vld [vmem:[%s298] sm:$0xf]
        %v354 = vld [vmem:[%s308] sm:$0xf]
        %v355 = vld [vmem:[#allocation8] sm:$0xf]
        %v356 = vld [vmem:[#allocation8 + $0x4] sm:$0xf]
        %v357 = vld [vmem:[#allocation8 + $0x8] sm:$0xf]
        %v358 = vld [vmem:[#allocation8 + $0xc] sm:$0xf]
        %v359 = vld [vmem:[%s4] sm:$0x1]
        %v361 = vperm.slane %v359, 0
        %v367 = vunpack.c.l.b16 %v355
        %v368 = vunpack.c.l.b16 %v356
        %v369 = vunpack.c.l.b16 %v357
        %v370 = vunpack.c.l.b16 %v358
        %v371 = vpack.c.b16 %v368, %v367
        %v372 = vpack.c.b16 %v370, %v369
        %vm375 = vcmask 261120
        %v377 = vsel %vm375, %v352, 0
        %379 = vmatpush.bf16.msra.mxu0 0
        %380 = vmatpush.bf16.msra.mxu0 0
        %381 = vmatpush.bf16.msra.mxu0 0
        %382 = vmatpush.bf16.msra.mxu0 0
        %383 = vmatpush.bf16.msra.mxu0 0
        %384 = vmatpush.bf16.msra.mxu0 0
        %385 = vmatpush.bf16.msra.mxu0 %v372
        %386 = vmatpush.bf16.msra.mxu0 %v371
        %387 = vmatmul.bf16.gmra.mxu0 %v377
        %v388 = vpop.f32.mrf.mxu0
        %v389 = vadd.f32 %v361, %v388
        %v390 = vpop.f32.mrf.mxu0
        %391 = vdwg.mxu0
        %392 = vrot.lane.b32.xlu0 %v371, 96
        %v393 = vpop.permute.xlu0 %392
        %394 = vrot.lane.b32.xlu0 %v372, 96
        %v395 = vpop.permute.xlu0 %394
        %398 = vrot.lane.b32.xlu0 %v361, 96
        %v399 = vpop.permute.xlu0 %398
        %v402 = vsel %vm375, %v353, 0
        %404 = vmatpush.bf16.msra.mxu0 0
        %405 = vmatpush.bf16.msra.mxu0 0
        %406 = vmatpush.bf16.msra.mxu0 0
        %407 = vmatpush.bf16.msra.mxu0 0
        %408 = vmatpush.bf16.msra.mxu0 0
        %409 = vmatpush.bf16.msra.mxu0 0
        %410 = vmatpush.bf16.msra.mxu0 %v395
        %411 = vmatpush.bf16.msra.mxu0 %v393
        %412 = vmatmul.bf16.gmra.mxu0 %v402
        %v413 = vpop.f32.mrf.mxu0
        %v414 = vadd.f32 %v399, %v413
        %v415 = vpop.f32.mrf.mxu0
        %416 = vdwg.mxu0
        %417 = vrot.lane.b32.xlu0 %v371, 64
        %v418 = vpop.permute.xlu0 %417
        %419 = vrot.lane.b32.xlu0 %v372, 64
        %v420 = vpop.permute.xlu0 %419
        %423 = vrot.lane.b32.xlu0 %v361, 64
        %v424 = vpop.permute.xlu0 %423
        %v427 = vsel %vm375, %v354, 0
        %429 = vmatpush.bf16.msra.mxu0 0
        %430 = vmatpush.bf16.msra.mxu0 0
        %431 = vmatpush.bf16.msra.mxu0 0
        %432 = vmatpush.bf16.msra.mxu0 0
        %433 = vmatpush.bf16.msra.mxu0 0
        %434 = vmatpush.bf16.msra.mxu0 0
        %435 = vmatpush.bf16.msra.mxu0 %v420
        %436 = vmatpush.bf16.msra.mxu0 %v418
        %437 = vmatmul.bf16.gmra.mxu0 %v427
        %v438 = vpop.f32.mrf.mxu0
        %v439 = vadd.f32 %v424, %v438
        %v440 = vpop.f32.mrf.mxu0
        %441 = vdwg.mxu0
        %v442 = vpack.c.bf16 %v389, %v389
        %v443 = vpack.c.bf16 %v414, %v414
        %v444 = vpack.c.bf16 %v439, %v439
        %vm445 = vcmask 64512
        %v447 = vsel %vm445, %v442, 0
        %v450 = vsel %vm445, %v443, 0
        %452 = vmatpush.bf16.xpose.msra.mxu0 0
        %453 = vmatpush.bf16.xpose.msra.mxu0 0
        %454 = vmatpush.bf16.xpose.msra.mxu0 0
        %455 = vmatpush.bf16.xpose.msra.mxu0 0
        %456 = vmatpush.bf16.xpose.msra.mxu0 0
        %457 = vmatpush.bf16.xpose.msra.mxu0 0
        %458 = vmatpush.bf16.xpose.msra.mxu0 0
        %459 = vmatpush.bf16.xpose.msra.mxu0 %v450
        %460 = vmatmul.bf16.gmra.mxu0 %v447
        %v461 = vpop.f32.mrf.mxu0
        %v462 = vadd.f32 0.0, %v461
        %v463 = vpop.f32.mrf.mxu0
        %464 = vdwg.mxu0
        %v465 = vsel %vm445, %v462, -inf
        %466 = vmax.xlane.f32.xlu0 %v465
        %v467 = vpop.xlane.xlu0 %466
        %v468 = vsub.f32 %v462, %v467
        %v469 = vmul.f32 %v468, 1.442695
        %v470 = vpow.pop %v469
        %v471 = vsel %vm445, %v470, 0.0
        %472 = vadd.xlane.f32.xlu0 %v471
        %v473 = vpop.xlane.xlu0 %472
        %v474 = vrcp.pop %v473
        %v475 = vmul.f32 %v470, %v474
        %v476 = vpack.c.bf16 %v475, %v475
        %v478 = vsel %vm445, %v476, 0
        %vm480 = vcmask 1043456
        %v482 = vsel %vm480, %v444, 0
        %484 = vmatpush.bf16.msra.mxu0 0
        %485 = vmatpush.bf16.msra.mxu0 0
        %486 = vmatpush.bf16.msra.mxu0 0
        %487 = vmatpush.bf16.msra.mxu0 0
        %488 = vmatpush.bf16.msra.mxu0 0
        %489 = vmatpush.bf16.msra.mxu0 0
        %490 = vmatpush.bf16.msra.mxu0 0
        %491 = vmatpush.bf16.msra.mxu0 %v482
        %492 = vmatmul.bf16.gmra.mxu0 %v478
        %v493 = vpop.f32.mrf.mxu0
        %v494 = vadd.f32 0.0, %v493
        %v495 = vpop.f32.mrf.mxu0
        %496 = vdwg.mxu0
        %v498 = vunpack.c.l.b16 %v442
        %v499 = vpack.c.b16 %v498, %v498
        %500 = vrot.lane.b32.xlu0 %v499, 120
        %v501 = vpop.permute.xlu0 %500
        %v503 = vunpack.c.l.b16 %v443
        %v504 = vpack.c.b16 %v503, %v503
        %505 = vrot.lane.b32.xlu0 %v504, 120
        %v506 = vpop.permute.xlu0 %505
        %v508 = vsel %vm445, %v501, 0
        %v511 = vsel %vm445, %v506, 0
        %513 = vmatpush.bf16.xpose.msra.mxu0 0
        %514 = vmatpush.bf16.xpose.msra.mxu0 0
        %515 = vmatpush.bf16.xpose.msra.mxu0 0
        %516 = vmatpush.bf16.xpose.msra.mxu0 0
        %517 = vmatpush.bf16.xpose.msra.mxu0 0
        %518 = vmatpush.bf16.xpose.msra.mxu0 0
        %519 = vmatpush.bf16.xpose.msra.mxu0 0
        %520 = vmatpush.bf16.xpose.msra.mxu0 %v511
        %521 = vmatmul.bf16.gmra.mxu0 %v508
        %v522 = vpop.f32.mrf.mxu0
        %v523 = vadd.f32 0.0, %v522
        %v524 = vpop.f32.mrf.mxu0
        %525 = vdwg.mxu0
        %v526 = vsel %vm445, %v523, -inf
        %527 = vmax.xlane.f32.xlu0 %v526
        %v528 = vpop.xlane.xlu0 %527
        %v529 = vsub.f32 %v523, %v528
        %v530 = vmul.f32 %v529, 1.442695
        %v531 = vpow.pop %v530
        %v532 = vsel %vm445, %v531, 0.0
        %533 = vadd.xlane.f32.xlu0 %v532
        %v534 = vpop.xlane.xlu0 %533
        %v535 = vrcp.pop %v534
        %v536 = vmul.f32 %v531, %v535
        %v537 = vpack.c.bf16 %v536, %v536
        %v539 = vunpack.c.l.b16 %v444
        %v540 = vpack.c.b16 %v539, %v539
        %541 = vrot.lane.b32.xlu0 %v540, 120
        %v542 = vpop.permute.xlu0 %541
        %v544 = vsel %vm445, %v537, 0
        %v547 = vsel %vm480, %v542, 0
        %549 = vmatpush.bf16.msra.mxu0 0
        %550 = vmatpush.bf16.msra.mxu0 0
        %551 = vmatpush.bf16.msra.mxu0 0
        %552 = vmatpush.bf16.msra.mxu0 0
        %553 = vmatpush.bf16.msra.mxu0 0
        %554 = vmatpush.bf16.msra.mxu0 0
        %555 = vmatpush.bf16.msra.mxu0 0
        %556 = vmatpush.bf16.msra.mxu0 %v547
        %557 = vmatmul.bf16.gmra.mxu0 %v544
        %v558 = vpop.f32.mrf.mxu0
        %v559 = vadd.f32 0.0, %v558
        %v560 = vpop.f32.mrf.mxu0
        %561 = vdwg.mxu0
        %562 = vrot.lane.b32.xlu0 %v499, 112
        %v563 = vpop.permute.xlu0 %562
        %564 = vrot.lane.b32.xlu0 %v504, 112
        %v565 = vpop.permute.xlu0 %564
        %v567 = vsel %vm445, %v563, 0
        %v570 = vsel %vm445, %v565, 0
        %572 = vmatpush.bf16.xpose.msra.mxu0 0
        %573 = vmatpush.bf16.xpose.msra.mxu0 0
        %574 = vmatpush.bf16.xpose.msra.mxu0 0
        %575 = vmatpush.bf16.xpose.msra.mxu0 0
        %576 = vmatpush.bf16.xpose.msra.mxu0 0
        %577 = vmatpush.bf16.xpose.msra.mxu0 0
        %578 = vmatpush.bf16.xpose.msra.mxu0 0
        %579 = vmatpush.bf16.xpose.msra.mxu0 %v570
        %580 = vmatmul.bf16.gmra.mxu0 %v567
        %v581 = vpop.f32.mrf.mxu0
        %v582 = vadd.f32 0.0, %v581
        %v583 = vpop.f32.mrf.mxu0
        %584 = vdwg.mxu0
        %v585 = vsel %vm445, %v582, -inf
        %586 = vmax.xlane.f32.xlu0 %v585
        %v587 = vpop.xlane.xlu0 %586
        %v588 = vsub.f32 %v582, %v587
        %v589 = vmul.f32 %v588, 1.442695
        %v590 = vpow.pop %v589
        %v591 = vsel %vm445, %v590, 0.0
        %592 = vadd.xlane.f32.xlu0 %v591
        %v593 = vpop.xlane.xlu0 %592
        %v594 = vrcp.pop %v593
        %v595 = vmul.f32 %v590, %v594
        %v596 = vpack.c.bf16 %v595, %v595
        %597 = vrot.lane.b32.xlu0 %v540, 112
        %v598 = vpop.permute.xlu0 %597
        %v600 = vsel %vm445, %v596, 0
        %v603 = vsel %vm480, %v598, 0
        %605 = vmatpush.bf16.msra.mxu0 0
        %606 = vmatpush.bf16.msra.mxu0 0
        %607 = vmatpush.bf16.msra.mxu0 0
        %608 = vmatpush.bf16.msra.mxu0 0
        %609 = vmatpush.bf16.msra.mxu0 0
        %610 = vmatpush.bf16.msra.mxu0 0
        %611 = vmatpush.bf16.msra.mxu0 0
        %612 = vmatpush.bf16.msra.mxu0 %v603
        %613 = vmatmul.bf16.gmra.mxu0 %v600
        %v614 = vpop.f32.mrf.mxu0
        %v615 = vadd.f32 0.0, %v614
        %v616 = vpop.f32.mrf.mxu0
        %617 = vdwg.mxu0
        %618 = vrot.lane.b32.xlu0 %v499, 104
        %v619 = vpop.permute.xlu0 %618
        %620 = vrot.lane.b32.xlu0 %v504, 104
        %v621 = vpop.permute.xlu0 %620
        %v623 = vsel %vm445, %v619, 0
        %v626 = vsel %vm445, %v621, 0
        %628 = vmatpush.bf16.xpose.msra.mxu0 0
        %629 = vmatpush.bf16.xpose.msra.mxu0 0
        %630 = vmatpush.bf16.xpose.msra.mxu0 0
        %631 = vmatpush.bf16.xpose.msra.mxu0 0
        %632 = vmatpush.bf16.xpose.msra.mxu0 0
        %633 = vmatpush.bf16.xpose.msra.mxu0 0
        %634 = vmatpush.bf16.xpose.msra.mxu0 0
        %635 = vmatpush.bf16.xpose.msra.mxu0 %v626
        %636 = vmatmul.bf16.gmra.mxu0 %v623
        %v637 = vpop.f32.mrf.mxu0
        %v638 = vadd.f32 0.0, %v637
        %v639 = vpop.f32.mrf.mxu0
        %640 = vdwg.mxu0
        %v641 = vsel %vm445, %v638, -inf
        %642 = vmax.xlane.f32.xlu0 %v641
        %v643 = vpop.xlane.xlu0 %642
        %v644 = vsub.f32 %v638, %v643
        %v645 = vmul.f32 %v644, 1.442695
        %v646 = vpow.pop %v645
        %v647 = vsel %vm445, %v646, 0.0
        %648 = vadd.xlane.f32.xlu0 %v647
        %v649 = vpop.xlane.xlu0 %648
        %v650 = vrcp.pop %v649
        %v651 = vmul.f32 %v646, %v650
        %v652 = vpack.c.bf16 %v651, %v651
        %653 = vrot.lane.b32.xlu0 %v540, 104
        %v654 = vpop.permute.xlu0 %653
        %v656 = vsel %vm445, %v652, 0
        %v659 = vsel %vm480, %v654, 0
        %661 = vmatpush.bf16.msra.mxu0 0
        %662 = vmatpush.bf16.msra.mxu0 0
        %663 = vmatpush.bf16.msra.mxu0 0
        %664 = vmatpush.bf16.msra.mxu0 0
        %665 = vmatpush.bf16.msra.mxu0 0
        %666 = vmatpush.bf16.msra.mxu0 0
        %667 = vmatpush.bf16.msra.mxu0 0
        %668 = vmatpush.bf16.msra.mxu0 %v659
        %669 = vmatmul.bf16.gmra.mxu0 %v656
        %v670 = vpop.f32.mrf.mxu0
        %v671 = vadd.f32 0.0, %v670
        %v672 = vpop.f32.mrf.mxu0
        %673 = vdwg.mxu0
        %675 = vrot.lane.b32.xlu0 %v559, 8
        %v676 = vpop.permute.xlu0 %675
        %679 = vrot.lane.b32.xlu0 %v615, 16
        %v680 = vpop.permute.xlu0 %679
        %683 = vrot.lane.b32.xlu0 %v671, 24
        %v684 = vpop.permute.xlu0 %683
        %v686 = vsel %vm445, %v494, %v676
        %vm687 = vcmask 130048
        %v688 = vsel %vm687, %v686, %v680
        %vm689 = vcmask 195584
        %v690 = vsel %vm689, %v688, %v684
        %v691 = vpack.c.bf16 %v690, %v690
        %692 = vrot.lane.b32.xlu0 %v371, 32
        %v693 = vpop.permute.xlu0 %692
        %694 = vrot.lane.b32.xlu0 %v372, 32
        %v695 = vpop.permute.xlu0 %694
        %698 = vrot.lane.b32.xlu0 %v361, 32
        %v699 = vpop.permute.xlu0 %698
        %v702 = vsel %vm375, %v691, 0
        %704 = vmatpush.bf16.msra.mxu0 0
        %705 = vmatpush.bf16.msra.mxu0 0
        %706 = vmatpush.bf16.msra.mxu0 0
        %707 = vmatpush.bf16.msra.mxu0 0
        %708 = vmatpush.bf16.msra.mxu0 0
        %709 = vmatpush.bf16.msra.mxu0 0
        %710 = vmatpush.bf16.msra.mxu0 %v695
        %711 = vmatpush.bf16.msra.mxu0 %v693
        %712 = vmatmul.bf16.gmra.mxu0 %v702
        %v713 = vpop.f32.mrf.mxu0
        %v714 = vadd.f32 %v699, %v713
        %v715 = vpop.f32.mrf.mxu0
        %716 = vdwg.mxu0
        %717 = vst.msk [vmem:[%s350] sm:$0xff] %vm375, %v714
        %s718 = sand.u32 %s170, 1
        %s719 = scalar_lea.sflag [#allocation4], %s718
        %s720 = sand.u32 %s170, 1
        %s721 = smul.addr %s720, 8
        %s722 = scalar_lea.vmem [#allocation10], %s721
        // Predicated region
        $region57: #{tpu_custom_call.1} parent=39 // pred_check
          %p723 = pneg %p180
        $region58: #{tpu_custom_call.1} parent=39 // pred_check_branch
          %725 = sbr.rel (%p723) target = $region60
        $region59: #{tpu_custom_call.1} parent=39 // pred_region
          %727 = vsyncadd %s719, 0
          %s728 = sadd.s32 %s31, %s30
          %s729 = smul.addr %s728, 8
          %s730 = scalar_lea.hbm %s5, %s729
          %s732 = sshll.u32 %s722, 4
          %s733 = int_to_ptr.vmem [resolvable:$true] %s732
          %s734 = sshll.u32 %s730, 4
          %s735 = int_to_ptr.hbm [resolvable:$true] %s734
          %737 = dma.vmem_to_hbm [thread:$0]  %s733, 128, %s735, %s719
        $region60: #{tpu_custom_call.1} parent=39 // pred_fallthru
          _
      $region40: #{tpu_custom_call.1} parent=5 // pred_fallthru
        _
      %p738 = scmp.le.s32.totalorder 2, %s21
      // Predicated region
      $region61: #{tpu_custom_call.1} parent=5 // pred_check
        %p739 = pneg %p738
      $region62: #{tpu_custom_call.1} parent=5 // pred_check_branch
        %741 = sbr.rel (%p739) target = $region64
      $region63: #{tpu_custom_call.1} parent=5 // pred_region
        %s742 = ssub.s32 %s21, 2
        // Predicated region
        $region65: #{tpu_custom_call.1} parent=63 // pred_check
          %p743 = pneg %p186
        $region66: #{tpu_custom_call.1} parent=63 // pred_check_branch
          %745 = sbr.rel (%p743) target = $region68
        $region67: #{tpu_custom_call.1} parent=63 // pred_region
          %s746 = sand.u32 %s171, 1
          %s747 = scalar_lea.sflag [#allocation4], %s746
          %s748 = sand.u32 %s171, 1
          %s749 = smul.addr %s748, 8
          %s750 = scalar_lea.vmem [#allocation10], %s749
          %752 = dma.done %s747, 128
        $region68: #{tpu_custom_call.1} parent=63 // pred_fallthru
          _
      $region64: #{tpu_custom_call.1} parent=5 // pred_fallthru
        _
    $region6: #{tpu_custom_call.1} parent=1 // loop_footer
      %s25 = sadd.s32 1, %s21
    $region7: #{tpu_custom_call.1} parent=1 // loop_footer_branch
      %20 = sbr.rel target = $region3
    $region8: #{tpu_custom_call.1} parent=1 // loop_exit
      _
    %753 = vsyncpa [#allocation3], 1
    %s754 = scalar_lea.sflag [#allocation3], 1
    %755 = vsyncpa %s754, 1
    %756 = vsyncpa [#allocation6], 1
    %s757 = scalar_lea.sflag [#allocation6], 1
    %758 = vsyncpa %s757, 1
    %759 = vsyncpa [#allocation9], 1
    %760 = vsyncpa [#allocation4], 1
    %s761 = scalar_lea.sflag [#allocation4], 1
    %762 = vsyncpa %s761, 1

</llo_original>
